<compile_context>
chip_gen: v6e
topology: v6e:2x2x1
jax: 0.10.0
libtpu: 0.0.40
codegen_flags: <defaults>
</compile_context>

<pallas_src>
import jax
import jax.numpy as jnp
from jax.experimental import pallas as pl
from jax.experimental.pallas import tpu as pltpu


_TR_TARGET = 256    # sublane-dim tile (multiple of 8)
_TC_TARGET = 1024   # lane-dim tile (multiple of 128)


def _wsilu_chunk_add_kernel(a_ref, b_ref, o_ref):
    a = a_ref[...].astype(jnp.float32)
    b = b_ref[...].astype(jnp.float32)
    ya = jax.nn.sigmoid(4.0 * a) * a
    yb = jax.nn.sigmoid(4.0 * b) * b
    o_ref[...] = (ya + yb).astype(o_ref.dtype)


def _choose_cols(m, max_cols=_TC_TARGET):
    """Largest multiple of 128 (<= max_cols) that divides m; fall back to m."""
    best = 0
    c = 128
    while c <= max_cols:
        if m % c == 0:
            best = c
        c += 128
    return best if best > 0 else m  # fallback: full-dim block (legal, masked)


def wsilu_chunk_add(x):
    """x: (N, C, H, W) with C even. Returns (N, C//2, H, W)."""
    N, C, H, W = x.shape
    assert C % 2 == 0, "channel dim must be even for chunk(2, 1)"
    ch = C // 2
    m = ch * H * W                     # elements per half per batch element

    cols = _choose_cols(m)             # lane-dense last dim when possible
    rows = m // cols
    tr = min(rows, _TR_TARGET)         # == rows (full dim) or multiple of 8
    tc = min(cols, _TC_TARGET)         # == cols by construction

    # Free contiguous reshape: row 2n holds half-0 of batch n, row 2n+1 half-1.
    xv = x.reshape(N * 2, rows, cols)

    grid = (N, pl.cdiv(rows, tr), pl.cdiv(cols, tc))

    out = pl.pallas_call(
        _wsilu_chunk_add_kernel,
        out_shape=jax.ShapeDtypeStruct((N, rows, cols), x.dtype),
        grid_spec=pltpu.PrefetchScalarGridSpec(
            num_scalar_prefetch=0,
            grid=grid,
            in_specs=[
                # half 0 of batch n
                pl.BlockSpec((1, tr, tc), lambda n, i, j: (2 * n, i, j)),
                # half 1 of batch n (same HBM buffer, different window)
                pl.BlockSpec((1, tr, tc), lambda n, i, j: (2 * n + 1, i, j)),
            ],
            out_specs=pl.BlockSpec((1, tr, tc), lambda n, i, j: (n, i, j)),
        ),
        compiler_params=pltpu.CompilerParams(
            dimension_semantics=("parallel", "parallel", "parallel"),
        ),
    )(xv, xv)

    return out.reshape(N, ch, H, W)


def _reference(x):
    y = jax.nn.sigmoid(4.0 * x) * x
    c = x.shape[1] // 2
    return y[:, :c] + y[:, c:]


if __name__ == "__main__":
    key = jax.random.PRNGKey(0)

    # Small shape consistent with the module (N=2, C=4, H=W=16).
    x = jax.random.normal(key, (2, 4, 16, 16), dtype=jnp.float32)
    out = jax.block_until_ready(wsilu_chunk_add(x))
    ref = _reference(x)
    assert out.shape == (2, 2, 16, 16)
    assert jnp.allclose(out, ref, atol=1e-5, rtol=1e-5)

    # Larger shape to exercise the multi-tile grid path (row tiling + halves).
    k2 = jax.random.PRNGKey(1)
    x2 = jax.random.normal(k2, (2, 16, 256, 256), dtype=jnp.float32)
    out2 = jax.block_until_ready(wsilu_chunk_add(x2))
    ref2 = _reference(x2)
    assert out2.shape == (2, 8, 256, 256)
    assert jnp.allclose(out2, ref2, atol=1e-5, rtol=1e-5)

    print("KERNEL_OK")
</pallas_src>

<mosaic_0001>
module attributes {stable_mosaic.version = 11 : i64} {
  func.func @_wsilu_chunk_add_kernel(%arg0: i32, %arg1: i32, %arg2: i32, %arg3: memref<1x1x512xf32, #tpu.memory_space<vmem>>, %arg4: memref<1x1x512xf32, #tpu.memory_space<vmem>>, %arg5: memref<1x1x512xf32, #tpu.memory_space<vmem>>) attributes {dimension_semantics = [#tpu.dimension_semantics<parallel>, #tpu.dimension_semantics<parallel>, #tpu.dimension_semantics<parallel>], iteration_bounds = array<i64: 2, 1, 1>, scalar_prefetch = 0 : i64, scratch_operands = 0 : i64, tpu.core_type = #tpu.core_type<tc>, window_params = [{transform_indices = @transform_0, window_bounds = array<i64: 1, 1, 512>}, {transform_indices = @transform_1, window_bounds = array<i64: 1, 1, 512>}, {transform_indices = @transform_2, window_bounds = array<i64: 1, 1, 512>}]} {
    %c0 = arith.constant 0 : index
    %c0_0 = arith.constant 0 : index
    %c0_1 = arith.constant 0 : index
    %0 = vector.load %arg3[%c0, %c0_0, %c0_1] : memref<1x1x512xf32, #tpu.memory_space<vmem>>, vector<1x1x512xf32>
    %c0_2 = arith.constant 0 : index
    %c0_3 = arith.constant 0 : index
    %c0_4 = arith.constant 0 : index
    %1 = vector.load %arg4[%c0_2, %c0_3, %c0_4] : memref<1x1x512xf32, #tpu.memory_space<vmem>>, vector<1x1x512xf32>
    %cst = arith.constant 4.000000e+00 : f32
    %2 = vector.broadcast %cst : f32 to vector<1x1x512xf32>
    %3 = arith.mulf %2, %0 : vector<1x1x512xf32>
    %4 = arith.negf %3 : vector<1x1x512xf32>
    %5 = math.exp %4 : vector<1x1x512xf32>
    %cst_5 = arith.constant 1.000000e+00 : f32
    %6 = vector.broadcast %cst_5 : f32 to vector<1x1x512xf32>
    %7 = arith.addf %6, %5 : vector<1x1x512xf32>
    %8 = arith.divf %6, %7 : vector<1x1x512xf32>
    %9 = arith.mulf %8, %0 : vector<1x1x512xf32>
    %cst_6 = arith.constant 4.000000e+00 : f32
    %10 = vector.broadcast %cst_6 : f32 to vector<1x1x512xf32>
    %11 = arith.mulf %10, %1 : vector<1x1x512xf32>
    %12 = arith.negf %11 : vector<1x1x512xf32>
    %13 = math.exp %12 : vector<1x1x512xf32>
    %cst_7 = arith.constant 1.000000e+00 : f32
    %14 = vector.broadcast %cst_7 : f32 to vector<1x1x512xf32>
    %15 = arith.addf %14, %13 : vector<1x1x512xf32>
    %16 = arith.divf %14, %15 : vector<1x1x512xf32>
    %17 = arith.mulf %16, %1 : vector<1x1x512xf32>
    %18 = arith.addf %9, %17 : vector<1x1x512xf32>
    %c0_8 = arith.constant 0 : index
    %c0_9 = arith.constant 0 : index
    %c0_10 = arith.constant 0 : index
    %19 = vector.load %arg5[%c0_8, %c0_9, %c0_10] : memref<1x1x512xf32, #tpu.memory_space<vmem>>, vector<1x1x512xf32>
    tpu.vector_store %arg5[%c0_8, %c0_9, %c0_10], %18 {strides = array<i32>} : memref<1x1x512xf32, #tpu.memory_space<vmem>>, vector<1x1x512xf32>,
    return
  }
  func.func @transform_0(%arg0: i32, %arg1: i32, %arg2: i32) -> (i32, i32, i32) {
    %c2_i32 = arith.constant 2 : i32
    %0 = arith.muli %c2_i32, %arg0 : i32
    %c0_i32 = arith.constant 0 : i32
    return %0, %arg1, %arg2 : i32, i32, i32
  }
  func.func @transform_1(%arg0: i32, %arg1: i32, %arg2: i32) -> (i32, i32, i32) {
    %c2_i32 = arith.constant 2 : i32
    %0 = arith.muli %c2_i32, %arg0 : i32
    %c1_i32 = arith.constant 1 : i32
    %1 = arith.addi %0, %c1_i32 : i32
    %c0_i32 = arith.constant 0 : i32
    return %1, %arg1, %arg2 : i32, i32, i32
  }
  func.func @transform_2(%arg0: i32, %arg1: i32, %arg2: i32) -> (i32, i32, i32) {
    %c0_i32 = arith.constant 0 : i32
    return %arg0, %arg1, %arg2 : i32, i32, i32
  }
}

</mosaic_0001>

<llo_original>
// kernel: tpu_custom_call.1
$region0: #{tpu_custom_call.1}
  #allocation0 [shape = 'u32[]', space=smem, size = 0x4, offset = 0x4, fixed_abs, tag = 'smem constant byte address 0x4 - core index']
  #allocation1 [shape = 'u32[144,128]{1,0:T(1,128)}', space=vmem, size = 0x12000, scoped, tag = 'internal scratch']
  %s0 = inlined_call_operand.hbm [shape: f32[4,1,512], index: 0, kind: input, shape index: {}]
  %s1 = inlined_call_operand.hbm [shape: f32[4,1,512], index: 1, kind: input, shape index: {}]
  %s2 = inlined_call_operand.hbm [shape: f32[2,1,512], index: 2, kind: output, shape index: {}]
  %s3 = sld [smem:[#allocation0]]
  $region49: #{tpu_custom_call.1} parent=0
    _
  %s5 = ssub.s32 1, %s3
  %s6 = scalar_select 0, %s5, %s3
  $region1: #{tpu_custom_call.1} parent=0
    #allocation2 [shape = 'u8[4096]{0}', space=vmem, size = 0x1000, scoped, tag = 'input window, operand 0']
    #allocation3 [shape = 's32[2]{0}', space=sflag, size = 0x8, scoped, tag = 'scoped memory for tpu_custom_call.1']
    #allocation4 [shape = 's32[2]{0}', space=sflag, size = 0x8, scoped, tag = 'scoped memory for tpu_custom_call.1']
    #allocation5 [shape = 'u8[4096]{0}', space=vmem, size = 0x1000, scoped, tag = 'input window, operand 1']
    #allocation6 [shape = 's32[2]{0}', space=sflag, size = 0x8, scoped, tag = 'scoped memory for tpu_custom_call.1']
    #allocation7 [shape = 'u8[4096]{0}', space=vmem, size = 0x1000, scoped, tag = 'output window, operand 0']
    %7 = vsyncpa [#allocation3], 0
    %s8 = scalar_lea.sflag [#allocation3], 1
    %9 = vsyncpa %s8, 0
    %10 = vsyncpa [#allocation6], 0
    %s11 = scalar_lea.sflag [#allocation6], 1
    %12 = vsyncpa %s11, 0
    %13 = vsyncpa [#allocation4], 0
    %s14 = scalar_lea.sflag [#allocation4], 1
    %15 = vsyncpa %s14, 0
    loop: start=0, step=1, limit=4
    $region2: #{tpu_custom_call.1} parent=1 // loop_pre_header
      _
    $region3: #{tpu_custom_call.1} parent=1 // loop_header
      %s17 = sphi 0, %s21
      %p18 = scmp.ge.s32.totalorder %s17, 4
      %s24 = sphi 0, %s43
      %s25 = sphi 0, %s39
      %s26 = sphi 0, %s35
      %s27 = sphi 0, %s24
      %s28 = sphi 0, %s25
      %s29 = sphi 0, %s26
      %s30 = sphi 0, %s27
      %s31 = sphi 0, %s28
      %s32 = sphi 0, %s29
      %s52 = sphi 0, %s54
      %s55 = sphi 0, %s52
      %s56 = sphi 0, %s55
      %s72 = sphi 0, %s56
      %s86 = sphi 0, %s88
      %s89 = sphi 0, %s86
      %s90 = sphi 0, %s89
      %s106 = sphi 0, %s90
      %s116 = sphi 0, %s118
      %s119 = sphi 0, %s116
      %s120 = sphi 0, %s119
      %s136 = sphi 0, %s120
    $region4: #{tpu_custom_call.1} parent=1 // loop_header_branch
      %20 = sbr.rel (%p18) target = $region8
    $region5: #{tpu_custom_call.1} parent=1 // loop_body
      %s22 = ssub.s32 %s17, 1
      %s23 = ssub.s32 %s17, 2
      %s33 = sadd.s32 1, %s26
      %p34 = scmp.ge.s32.totalorder %s33, 1
      %s35 = scalar_select %p34, 0, %s33
      %s36 = sadd.s32 1, %s25
      %s37 = scalar_select %p34, %s36, %s25
      %p38 = scmp.ge.s32.totalorder %s37, 1
      %s39 = scalar_select %p38, 0, %s37
      %s40 = sadd.s32 1, %s24
      %s41 = scalar_select %p38, %s40, %s24
      %p42 = scmp.ge.s32.totalorder %s41, 2
      %s43 = scalar_select %p42, 0, %s41
      %s44 = smul.u32 %s24, 2
      %s45 = smul.u32 %s43, 2
      %s46 = ssub.s32 %s44, %s45
      %s47 = ssub.s32 %s25, %s39
      %s48 = sor.u32 %s46, %s47
      %s49 = ssub.s32 %s26, %s35
      %s50 = sor.u32 %s48, %s49
      %p51 = scmp.eq.s32.totalorder %s50, 0
      %s53 = sadd.s32 %s52, 1
      %s54 = scalar_select %p51, %s52, %s53
      %p57 = pneg %p51
      %p58 = scmp.eq.s32.totalorder %s17, 1
      %p59 = por %p57, %p58
      %p60 = scmp.ne.s32.totalorder %s52, %s55
      %p61 = scmp.eq.s32.totalorder %s17, 0
      %p62 = por %p60, %p61
      %p63 = scmp.ne.s32.totalorder %s52, %s55
      %p64 = scmp.eq.s32.totalorder %s22, 1
      %p65 = por %p63, %p64
      %p66 = scmp.ne.s32.totalorder %s55, %s56
      %p67 = scmp.eq.s32.totalorder %s22, 0
      %p68 = por %p66, %p67
      %p69 = scmp.ne.s32.totalorder %s55, %s56
      %p70 = scmp.eq.s32.totalorder %s23, 1
      %p71 = por %p69, %p70
      %p73 = scmp.ne.s32.totalorder %s56, %s72
      %p74 = scmp.eq.s32.totalorder %s23, 0
      %p75 = por %p73, %p74
      %s76 = smul.u32 %s24, 2
      %s77 = sadd.s32 %s76, 1
      %s78 = smul.u32 %s43, 2
      %s79 = sadd.s32 %s78, 1
      %s80 = ssub.s32 %s77, %s79
      %s81 = ssub.s32 %s25, %s39
      %s82 = sor.u32 %s80, %s81
      %s83 = ssub.s32 %s26, %s35
      %s84 = sor.u32 %s82, %s83
      %p85 = scmp.eq.s32.totalorder %s84, 0
      %s87 = sadd.s32 %s86, 1
      %s88 = scalar_select %p85, %s86, %s87
      %p91 = pneg %p85
      %p92 = scmp.eq.s32.totalorder %s17, 1
      %p93 = por %p91, %p92
      %p94 = scmp.ne.s32.totalorder %s86, %s89
      %p95 = scmp.eq.s32.totalorder %s17, 0
      %p96 = por %p94, %p95
      %p97 = scmp.ne.s32.totalorder %s86, %s89
      %p98 = scmp.eq.s32.totalorder %s22, 1
      %p99 = por %p97, %p98
      %p100 = scmp.ne.s32.totalorder %s89, %s90
      %p101 = scmp.eq.s32.totalorder %s22, 0
      %p102 = por %p100, %p101
      %p103 = scmp.ne.s32.totalorder %s89, %s90
      %p104 = scmp.eq.s32.totalorder %s23, 1
      %p105 = por %p103, %p104
      %p107 = scmp.ne.s32.totalorder %s90, %s106
      %p108 = scmp.eq.s32.totalorder %s23, 0
      %p109 = por %p107, %p108
      %s110 = ssub.s32 %s24, %s43
      %s111 = ssub.s32 %s25, %s39
      %s112 = sor.u32 %s110, %s111
      %s113 = ssub.s32 %s26, %s35
      %s114 = sor.u32 %s112, %s113
      %p115 = scmp.eq.s32.totalorder %s114, 0
      %s117 = sadd.s32 %s116, 1
      %s118 = scalar_select %p115, %s116, %s117
      %p121 = pneg %p115
      %p122 = scmp.eq.s32.totalorder %s17, 1
      %p123 = por %p121, %p122
      %p124 = scmp.ne.s32.totalorder %s116, %s119
      %p125 = scmp.eq.s32.totalorder %s17, 0
      %p126 = por %p124, %p125
      %p127 = scmp.ne.s32.totalorder %s116, %s119
      %p128 = scmp.eq.s32.totalorder %s22, 1
      %p129 = por %p127, %p128
      %p130 = scmp.ne.s32.totalorder %s119, %s120
      %p131 = scmp.eq.s32.totalorder %s22, 0
      %p132 = por %p130, %p131
      %p133 = scmp.ne.s32.totalorder %s119, %s120
      %p134 = scmp.eq.s32.totalorder %s23, 1
      %p135 = por %p133, %p134
      %p137 = scmp.ne.s32.totalorder %s120, %s136
      %p138 = scmp.eq.s32.totalorder %s23, 0
      %p139 = por %p137, %p138
      %p140 = scmp.le.s32.totalorder 1, %s17
      %p141 = scmp.lt.s32.totalorder %s17, 3
      %p142 = pnand %p140, %p141
      %p143 = pneg %p142
      // Predicated region
      $region9: #{tpu_custom_call.1} parent=5 // pred_check
        _
      $region10: #{tpu_custom_call.1} parent=5 // pred_check_branch
        %145 = sbr.rel (%p142) target = $region12
      $region11: #{tpu_custom_call.1} parent=5 // pred_region
        %s146 = ssub.s32 %s17, 1
      $region12: #{tpu_custom_call.1} parent=5 // pred_fallthru
        _
      %p147 = scmp.lt.s32.totalorder %s17, 2
      // Predicated region
      $region13: #{tpu_custom_call.1} parent=5 // pred_check
        %p148 = pneg %p147
      $region14: #{tpu_custom_call.1} parent=5 // pred_check_branch
        %150 = sbr.rel (%p148) target = $region16
      $region15: #{tpu_custom_call.1} parent=5 // pred_region
        // Predicated region
        $region17: #{tpu_custom_call.1} parent=15 // pred_check
          %p151 = pneg %p62
        $region18: #{tpu_custom_call.1} parent=15 // pred_check_branch
          %153 = sbr.rel (%p151) target = $region20
        $region19: #{tpu_custom_call.1} parent=15 // pred_region
          %s154 = sand.u32 %s52, 1
          %s155 = scalar_lea.sflag [#allocation3], %s154
          %s156 = sand.u32 %s52, 1
          %s157 = smul.addr %s156, 4
          %s158 = scalar_lea.vmem [#allocation2], %s157
          %s159 = smul.u32 %s24, 2
          %s160 = smul.u32 4, %s26
          %s162 = ssub.s32 64, 64
          %163 = vsyncadd %s155, %s162
          %s164 = smul.addr %s25, 4
          %s165 = sadd.s32 %s160, %s164
          %s166 = smul.addr %s159, 4
          %s167 = sadd.s32 %s165, %s166
          %s168 = smul.addr %s167, 16
          %s169 = scalar_lea.hbm %s0, %s168
          %s171 = sshll.u32 %s158, 4
          %s172 = int_to_ptr.vmem [resolvable:$true] %s171
          %174 = dma.hbm_to_vmem [thread:$0]  %s169, 64, %s172, %s155
        $region20: #{tpu_custom_call.1} parent=15 // pred_fallthru
          _
        // Predicated region
        $region21: #{tpu_custom_call.1} parent=15 // pred_check
          %p175 = pneg %p96
        $region22: #{tpu_custom_call.1} parent=15 // pred_check_branch
          %177 = sbr.rel (%p175) target = $region24
        $region23: #{tpu_custom_call.1} parent=15 // pred_region
          %s178 = sand.u32 %s86, 1
          %s179 = scalar_lea.sflag [#allocation6], %s178
          %s180 = sand.u32 %s86, 1
          %s181 = smul.addr %s180, 4
          %s182 = scalar_lea.vmem [#allocation5], %s181
          %s183 = smul.u32 %s24, 2
          %s184 = sadd.s32 %s183, 1
          %s185 = smul.u32 4, %s26
          %s187 = ssub.s32 64, 64
          %188 = vsyncadd %s179, %s187
          %s189 = smul.addr %s25, 4
          %s190 = sadd.s32 %s185, %s189
          %s191 = smul.addr %s184, 4
          %s192 = sadd.s32 %s190, %s191
          %s193 = smul.addr %s192, 16
          %s194 = scalar_lea.hbm %s1, %s193
          %s196 = sshll.u32 %s182, 4
          %s197 = int_to_ptr.vmem [resolvable:$true] %s196
          %199 = dma.hbm_to_vmem [thread:$0]  %s194, 64, %s197, %s179
        $region24: #{tpu_custom_call.1} parent=15 // pred_fallthru
          _
      $region16: #{tpu_custom_call.1} parent=5 // pred_fallthru
        _
      %p200 = scmp.le.s32.totalorder 1, %s17
      %p201 = scmp.lt.s32.totalorder %s17, 3
      %p202 = pnand %p200, %p201
      %p203 = pneg %p202
      // Predicated region
      $region25: #{tpu_custom_call.1} parent=5 // pred_check
        _
      $region26: #{tpu_custom_call.1} parent=5 // pred_check_branch
        %205 = sbr.rel (%p202) target = $region28
      $region27: #{tpu_custom_call.1} parent=5 // pred_region
        %s206 = ssub.s32 %s17, 1
        %s207 = sand.u32 %s55, 1
        %s208 = scalar_lea.sflag [#allocation3], %s207
        %s209 = sand.u32 %s55, 1
        %s210 = smul.addr %s209, 4
        %s211 = scalar_lea.vmem [#allocation2], %s210
        // Predicated region
        $region29: #{tpu_custom_call.1} parent=27 // pred_check
          %p212 = pneg %p68
        $region30: #{tpu_custom_call.1} parent=27 // pred_check_branch
          %214 = sbr.rel (%p212) target = $region32
        $region31: #{tpu_custom_call.1} parent=27 // pred_region
          %215 = dma.done %s208, 64
        $region32: #{tpu_custom_call.1} parent=27 // pred_fallthru
          _
        %s216 = sand.u32 %s89, 1
        %s217 = scalar_lea.sflag [#allocation6], %s216
        %s218 = sand.u32 %s89, 1
        %s219 = smul.addr %s218, 4
        %s220 = scalar_lea.vmem [#allocation5], %s219
        // Predicated region
        $region33: #{tpu_custom_call.1} parent=27 // pred_check
          %p221 = pneg %p102
        $region34: #{tpu_custom_call.1} parent=27 // pred_check_branch
          %223 = sbr.rel (%p221) target = $region36
        $region35: #{tpu_custom_call.1} parent=27 // pred_region
          %224 = dma.done %s217, 64
        $region36: #{tpu_custom_call.1} parent=27 // pred_fallthru
          _
        %s225 = sand.u32 %s55, 1
        %s226 = scalar_lea.sflag [#allocation3], %s225
        %s227 = sand.u32 %s55, 1
        %s228 = smul.addr %s227, 4
        %s229 = scalar_lea.vmem [#allocation2], %s228
        %p230 = pneg %p68
        %p231 = pneg %p65
        %s232 = sand.u32 %s89, 1
        %s233 = scalar_lea.sflag [#allocation6], %s232
        %s234 = sand.u32 %s89, 1
        %s235 = smul.addr %s234, 4
        %s236 = scalar_lea.vmem [#allocation5], %s235
        %p237 = pneg %p102
        %p238 = pneg %p99
        %p239 = pneg %p132
        %p240 = pneg %p129
        %s241 = sand.u32 %s119, 1
        %s242 = scalar_lea.sflag [#allocation4], %s241
        %s243 = sand.u32 %s119, 1
        %s244 = smul.addr %s243, 4
        %s245 = scalar_lea.vmem [#allocation7], %s244
        %s246 = smul.u32 %s27, 2
        %s247 = smul.u32 4, %s29
        %s248 = smul.u32 %s27, 2
        %s249 = sadd.s32 %s248, 1
        %s250 = smul.u32 4, %s29
        %s251 = smul.u32 4, %s29
        %v252 = vld [vmem:[%s211] sm:$0xf]
        %v253 = vld [vmem:[%s220] sm:$0xf]
        %v254 = vmul.f32 %v252, 4.0
        %v255 = vxor.u32 %v254, 2147483648
        %v256 = vmul.f32 %v255, 1.442695
        %v257 = vpow.pop %v256
        %v258 = vadd.f32 %v257, 1.0
        %v259 = vrcp.pop %v258
        %v260 = vmul.f32 1.0, %v259
        %v261 = vmul.f32 %v260, %v252
        %v262 = vmul.f32 %v253, 4.0
        %v263 = vxor.u32 %v262, 2147483648
        %v264 = vmul.f32 %v263, 1.442695
        %v265 = vpow.pop %v264
        %v266 = vadd.f32 %v265, 1.0
        %v267 = vrcp.pop %v266
        %v268 = vmul.f32 1.0, %v267
        %v269 = vmul.f32 %v268, %v253
        %v270 = vadd.f32 %v261, %v269
        %v271 = vlaneseq
        %vm272 = vcmp.ge.s32.totalorder %v271, 0
        %vm273 = vcmp.lt.s32.totalorder %v271, 512
        %vm274 = vmand %vm272, %vm273
        %275 = vst.msk [vmem:[%s245] sm:$0xf] %vm274, %v270
        %s276 = sand.u32 %s119, 1
        %s277 = scalar_lea.sflag [#allocation4], %s276
        %s278 = sand.u32 %s119, 1
        %s279 = smul.addr %s278, 4
        %s280 = scalar_lea.vmem [#allocation7], %s279
        // Predicated region
        $region37: #{tpu_custom_call.1} parent=27 // pred_check
          %p281 = pneg %p129
        $region38: #{tpu_custom_call.1} parent=27 // pred_check_branch
          %283 = sbr.rel (%p281) target = $region40
        $region39: #{tpu_custom_call.1} parent=27 // pred_region
          %s284 = smul.u32 4, %s29
          %s286 = ssub.s32 64, 64
          %287 = vsyncadd %s277, %s286
          %s288 = smul.addr %s28, 4
          %s289 = sadd.s32 %s284, %s288
          %s290 = smul.addr %s27, 4
          %s291 = sadd.s32 %s289, %s290
          %s292 = smul.addr %s291, 16
          %s293 = scalar_lea.hbm %s2, %s292
          %s295 = sshll.u32 %s280, 4
          %s296 = int_to_ptr.vmem [resolvable:$true] %s295
          %298 = dma.vmem_to_hbm [thread:$0]  %s296, 64, %s293, %s277
        $region40: #{tpu_custom_call.1} parent=27 // pred_fallthru
          _
      $region28: #{tpu_custom_call.1} parent=5 // pred_fallthru
        _
      %p299 = scmp.le.s32.totalorder 2, %s17
      // Predicated region
      $region41: #{tpu_custom_call.1} parent=5 // pred_check
        %p300 = pneg %p299
      $region42: #{tpu_custom_call.1} parent=5 // pred_check_branch
        %302 = sbr.rel (%p300) target = $region44
      $region43: #{tpu_custom_call.1} parent=5 // pred_region
        %s303 = ssub.s32 %s17, 2
        // Predicated region
        $region45: #{tpu_custom_call.1} parent=43 // pred_check
          %p304 = pneg %p135
        $region46: #{tpu_custom_call.1} parent=43 // pred_check_branch
          %306 = sbr.rel (%p304) target = $region48
        $region47: #{tpu_custom_call.1} parent=43 // pred_region
          %s307 = sand.u32 %s120, 1
          %s308 = scalar_lea.sflag [#allocation4], %s307
          %s309 = sand.u32 %s120, 1
          %s310 = smul.addr %s309, 4
          %s311 = scalar_lea.vmem [#allocation7], %s310
          %312 = dma.done %s308, 64
        $region48: #{tpu_custom_call.1} parent=43 // pred_fallthru
          _
      $region44: #{tpu_custom_call.1} parent=5 // pred_fallthru
        _
    $region6: #{tpu_custom_call.1} parent=1 // loop_footer
      %s21 = sadd.s32 1, %s17
    $region7: #{tpu_custom_call.1} parent=1 // loop_footer_branch
      %16 = sbr.rel target = $region3
    $region8: #{tpu_custom_call.1} parent=1 // loop_exit
      _
    %313 = vsyncpa [#allocation3], 1
    %s314 = scalar_lea.sflag [#allocation3], 1
    %315 = vsyncpa %s314, 1
    %316 = vsyncpa [#allocation6], 1
    %s317 = scalar_lea.sflag [#allocation6], 1
    %318 = vsyncpa %s317, 1
    %319 = vsyncpa [#allocation4], 1
    %s320 = scalar_lea.sflag [#allocation4], 1
    %321 = vsyncpa %s320, 1

</llo_original>
